<compile_context>
chip_gen: v5e
topology: v5e:2x2
jax: 0.10.0
libtpu: 0.0.40
codegen_flags: <defaults>
</compile_context>

<pallas_src>
import functools
import math

import jax
import jax.numpy as jnp
from jax import lax
from jax.experimental import pallas as pl
from jax.experimental.pallas import tpu as pltpu

_VMEM_LIMIT = 48 * 1024 * 1024


# ----------------------------- tiled linear (embedding) ---------------------
def _linear_kernel(x_ref, w_ref, b_ref, o_ref):
    # x: (TM, K) f32, w: (K, N) bf16, b: (1, N) f32
    acc = jnp.dot(x_ref[...].astype(jnp.bfloat16), w_ref[...],
                  preferred_element_type=jnp.float32)
    o_ref[...] = (acc + b_ref[...]).astype(o_ref.dtype)


def _pick_row_tile(M, pref=512):
    if M <= pref:
        return M
    for t in (512, 384, 256, 128, 64, 32, 16, 8):
        if M % t == 0:
            return t
    return M


def pallas_linear(x, w, b=None):
    """x: (M, K) @ w: (K, N) + b -> (M, N).  Weight stays resident (Buffered(1))."""
    M, K = x.shape
    N = w.shape[1]
    if b is None:
        b = jnp.zeros((N,), jnp.float32)
    b2 = b.reshape(1, N).astype(jnp.float32)
    tm = _pick_row_tile(M)
    return pl.pallas_call(
        _linear_kernel,
        out_shape=jax.ShapeDtypeStruct((M, N), x.dtype),
        grid=(M // tm,),
        in_specs=[pl.BlockSpec((tm, K), lambda i: (i, 0)),
                  pl.BlockSpec((K, N), lambda i: (0, 0),
                               pipeline_mode=pl.Buffered(1)),
                  pl.BlockSpec((1, N), lambda i: (0, 0),
                               pipeline_mode=pl.Buffered(1))],
        out_specs=pl.BlockSpec((tm, N), lambda i: (i, 0)),
        compiler_params=pltpu.CompilerParams(
            dimension_semantics=("parallel",),
            vmem_limit_bytes=_VMEM_LIMIT),
    )(x, w, b2)


# ----------------------- fused transformer encoder layer --------------------
def _encoder_layer_kernel(*refs, nhead, d_model, bblk, seq, add_pe, fuse_cls):
    it = iter(refs)
    x_ref = next(it)
    pe_ref = next(it) if add_pe else None
    wqkv_ref = next(it); bqkv_ref = next(it)
    wo_ref = next(it);   bo_ref = next(it)
    g1_ref = next(it);   be1_ref = next(it)
    w1_ref = next(it);   b1_ref = next(it)
    w2_ref = next(it);   b2_ref = next(it)
    g2_ref = next(it);   be2_ref = next(it)
    if fuse_cls:
        wcls_ref = next(it); bcls_ref = next(it)
    o_ref = next(it)

    hd = d_model // nhead
    eps = 1e-5
    M = bblk * seq

    x3 = x_ref[...].astype(jnp.float32)                    # (bblk, S, D)
    if add_pe:                                              # fused absolute PE add
        x3 = x3 + pe_ref[...][None, :, :]
    x = x3.reshape(M, d_model)

    # ---- packed QKV projection: one (M,D)x(D,3D) bf16 matmul, f32 accumulate ----
    qkv = jnp.dot(x.astype(jnp.bfloat16), wqkv_ref[...],
                  preferred_element_type=jnp.float32)
    qkv = (qkv + bqkv_ref[...]).astype(jnp.bfloat16)        # single cast for q/k/v
    qkv3 = qkv.reshape(bblk, seq, 3 * d_model)
    # (softmax 1/sqrt(hd) scale already folded into wqkv/bqkv q-columns at init)

    # ---- head split: O(nhead) static lane slices, batched over the batch block ----
    def heads(base):
        return [qkv3[:, :, base + h * hd: base + (h + 1) * hd] for h in range(nhead)]

    def cat0(ts):
        return ts[0] if len(ts) == 1 else jnp.concatenate(ts, axis=0)

    q3 = cat0(heads(0))                 # (G, S, hd), G = nhead*bblk (index h*bblk + b)
    k3 = cat0(heads(d_model))
    v3 = cat0(heads(2 * d_model))

    # ---- one batched score einsum + one batched context einsum over G ----
    s = jnp.einsum('gqd,gkd->gqk', q3, k3, preferred_element_type=jnp.float32)
    s = s - jnp.max(s, axis=-1, keepdims=True)
    p = jnp.exp(s)
    p = p * pl.reciprocal(jnp.sum(p, axis=-1, keepdims=True), approx=True)
    ctx = jnp.einsum('gqk,gkd->gqd', p.astype(jnp.bfloat16), v3,
                     preferred_element_type=jnp.float32)    # (G, S, hd)

    # merge heads back to (M, D): one lane-concat over heads
    ctx3 = jnp.concatenate([ctx[h * bblk:(h + 1) * bblk] for h in range(nhead)],
                           axis=-1) if nhead > 1 else ctx   # (bblk, S, D)
    ctx2 = ctx3.reshape(M, d_model).astype(jnp.bfloat16)

    # ---- output projection (full-K), residual, LayerNorm 1 ----
    attn = jnp.dot(ctx2, wo_ref[...], preferred_element_type=jnp.float32) + bo_ref[...]
    x = x + attn                                            # dropout = identity
    mu = jnp.mean(x, axis=-1, keepdims=True)
    var = jnp.mean((x - mu) ** 2, axis=-1, keepdims=True)
    x = (x - mu) * lax.rsqrt(var + eps) * g1_ref[...] + be1_ref[...]

    # ---- feed-forward: Linear -> ReLU -> Linear, residual, LayerNorm 2 ----
    h1 = jnp.dot(x.astype(jnp.bfloat16), w1_ref[...],
                 preferred_element_type=jnp.float32) + b1_ref[...]
    h1 = jnp.maximum(h1, 0.0)
    ff = jnp.dot(h1.astype(jnp.bfloat16), w2_ref[...],
                 preferred_element_type=jnp.float32) + b2_ref[...]
    x = x + ff
    mu = jnp.mean(x, axis=-1, keepdims=True)
    var = jnp.mean((x - mu) ** 2, axis=-1, keepdims=True)
    x = (x - mu) * lax.rsqrt(var + eps) * g2_ref[...] + be2_ref[...]

    if fuse_cls:
        # fused classifier Linear(D, 1): lane reduction, no (M,1) matmul / extra HBM trip
        xc = x.reshape(bblk, seq, d_model)
        w = wcls_ref[...].astype(jnp.float32).reshape(1, 1, d_model)
        y = jnp.sum(xc * w, axis=-1) + bcls_ref[...]        # (bblk, S)
        o_ref[...] = y.reshape(1, bblk, seq).astype(o_ref.dtype)
    else:
        o_ref[...] = x.reshape(bblk, seq, d_model).astype(o_ref.dtype)


def _pick_bblk(B, S, target_rows=512):
    """Largest divisor of B with bblk*S <= target_rows, preferring >= 2 grid steps
    (pipelining + v7x's two TensorCores)."""
    divs = [d for d in range(1, B + 1) if B % d == 0]
    cands = [d for d in divs if d * S <= target_rows and B // d >= 2]
    if not cands:
        cands = [d for d in divs if d * S <= target_rows] or [1]
    return max(cands)


def pallas_encoder_layer(x, lp, nhead, *, pe=None, cls=None):
    """One fused encoder layer.  Optionally fuses the PE add (first layer) and the
    classifier head (last layer, returns (B, S))."""
    B, S, D = x.shape
    dff = lp['w1'].shape[1]
    bblk = _pick_bblk(B, S)
    add_pe = pe is not None
    fuse_cls = cls is not None

    kernel = functools.partial(_encoder_layer_kernel, nhead=nhead, d_model=D,
                               bblk=bblk, seq=S, add_pe=add_pe, fuse_cls=fuse_cls)

    def wspec(shape):   # resident (constant-index) operands: single-buffered
        return pl.BlockSpec(shape, lambda i: (0, 0), pipeline_mode=pl.Buffered(1))

    in_specs = [pl.BlockSpec((bblk, S, D), lambda i: (i, 0, 0))]
    args = [x]
    if add_pe:
        in_specs.append(wspec((S, D)))
        args.append(pe.astype(jnp.float32))
    in_specs += [wspec((D, 3 * D)), wspec((1, 3 * D)),
                 wspec((D, D)), wspec((1, D)),
                 wspec((1, D)), wspec((1, D)),
                 wspec((D, dff)), wspec((1, dff)),
                 wspec((dff, D)), wspec((1, D)),
                 wspec((1, D)), wspec((1, D))]
    args += [lp['wqkv'], lp['bqkv'].reshape(1, -1),
             lp['wo'], lp['bo'].reshape(1, -1),
             lp['g1'].reshape(1, -1), lp['be1'].reshape(1, -1),
             lp['w1'], lp['b1'].reshape(1, -1),
             lp['w2'], lp['b2'].reshape(1, -1),
             lp['g2'].reshape(1, -1), lp['be2'].reshape(1, -1)]

    if fuse_cls:
        wcls, bcls = cls
        in_specs += [wspec((1, D)), wspec((1, 1))]
        args += [wcls, bcls.reshape(1, 1)]
        nsteps = B // bblk
        out_shape = jax.ShapeDtypeStruct((nsteps, bblk, S), x.dtype)
        out_specs = pl.BlockSpec((1, bblk, S), lambda i: (i, 0, 0))
    else:
        out_shape = jax.ShapeDtypeStruct((B, S, D), x.dtype)
        out_specs = pl.BlockSpec((bblk, S, D), lambda i: (i, 0, 0))

    out = pl.pallas_call(
        kernel,
        out_shape=out_shape,
        grid=(B // bblk,),
        in_specs=in_specs,
        out_specs=out_specs,
        compiler_params=pltpu.CompilerParams(
            dimension_semantics=("parallel",),
            vmem_limit_bytes=_VMEM_LIMIT),
    )(*args)

    if fuse_cls:
        return out.reshape(B, S)
    return out


# ------------------------------ glue / setup --------------------------------
def sinusoidal_pe(max_len, d_model):
    # matches PositionalEncoding.__init__ (base 3000.0)
    position = jnp.arange(max_len, dtype=jnp.float32)[:, None]
    div_term = jnp.exp(jnp.arange(0, d_model, 2, dtype=jnp.float32)
                       * (-math.log(3000.0) / d_model))
    pe = jnp.zeros((max_len, d_model), dtype=jnp.float32)
    pe = pe.at[:, 0::2].set(jnp.sin(position * div_term))
    pe = pe.at[:, 1::2].set(jnp.cos(position * div_term))
    return pe


def init_params(key, d_model, num_layers, nhead, dim_feedforward, scaleup_dim):
    D = scaleup_dim
    assert D % nhead == 0
    hd = D // nhead
    qscale = 1.0 / math.sqrt(hd)
    wdt = jnp.bfloat16   # matmul weights stored bf16 (MXU-native); biases/LN stay f32
    keys = jax.random.split(key, 2 + 4 * num_layers)
    params = {
        # ScaleupEmbedding e: (out_dim, input_dim, 1) -> stored pre-transposed (K,N)=(d_model,D)
        'W_emb': (0.1 * jax.random.normal(keys[0], (d_model, D), jnp.float32)).astype(wdt),
        'pe': sinusoidal_pe(512, D),
        'W_cls': 0.1 * jax.random.normal(keys[1], (1, D), jnp.float32),
        'b_cls': jnp.zeros((1,), jnp.float32),
        'layers': [],
    }
    for l in range(num_layers):
        k = keys[2 + 4 * l: 2 + 4 * (l + 1)]
        # weights stored (K, N) = already-transposed vs nn.Linear's (N, K)
        wqkv = 0.1 * jax.random.normal(k[0], (D, 3 * D), jnp.float32)
        bqkv = jnp.zeros((3 * D,), jnp.float32)
        # fold the 1/sqrt(head_dim) softmax scale into the q columns once (free at init)
        wqkv = wqkv.at[:, :D].multiply(qscale)
        bqkv = bqkv.at[:D].multiply(qscale)
        params['layers'].append({
            'wqkv': wqkv.astype(wdt),
            'bqkv': bqkv,
            'wo': (0.1 * jax.random.normal(k[1], (D, D), jnp.float32)).astype(wdt),
            'bo': jnp.zeros((D,), jnp.float32),
            'g1': jnp.ones((D,), jnp.float32),
            'be1': jnp.zeros((D,), jnp.float32),
            'w1': (0.1 * jax.random.normal(k[2], (D, dim_feedforward), jnp.float32)).astype(wdt),
            'b1': jnp.zeros((dim_feedforward,), jnp.float32),
            'w2': (0.1 * jax.random.normal(k[3], (dim_feedforward, D), jnp.float32)).astype(wdt),
            'b2': jnp.zeros((D,), jnp.float32),
            'g2': jnp.ones((D,), jnp.float32),
            'be2': jnp.zeros((D,), jnp.float32),
        })
    return params


def transformer_encoder_forward(src, params, nhead):
    """src: [batch, seq, d_model] -> out: [batch, seq]"""
    B, S, d_in = src.shape
    D = params['W_emb'].shape[1]
    n = len(params['layers'])
    assert n >= 1

    # ScaleupEmbedding (conv1d kernel=1, stride=1, no bias) == tiled Pallas matmul
    x = pallas_linear(src.reshape(B * S, d_in), params['W_emb']).reshape(B, S, D)

    # encoder layers: PE add fused into layer 0, classifier fused into layer n-1
    for li, lp in enumerate(params['layers']):
        pe = params['pe'][:S, :] if li == 0 else None
        cls = (params['W_cls'], params['b_cls']) if li == n - 1 else None
        x = pallas_encoder_layer(x, lp, nhead, pe=pe, cls=cls)
    return x   # (B, S)


if __name__ == "__main__":
    # small config: 16 input features, scaleup to 32, 2 layers, 4 heads
    batch, seq, d_model = 2, 8, 16
    num_layers, nhead, dim_feedforward, scaleup_dim = 2, 4, 64, 32

    key = jax.random.PRNGKey(0)
    k_x, k_p = jax.random.split(key)
    src = jax.random.normal(k_x, (batch, seq, d_model), jnp.float32)
    params = init_params(k_p, d_model, num_layers, nhead, dim_feedforward,
                         scaleup_dim)

    out = transformer_encoder_forward(src, params, nhead)
    out = jax.block_until_ready(out)
    assert out.shape == (batch, seq), out.shape
    assert bool(jnp.all(jnp.isfinite(out))), "non-finite output"
    print("KERNEL_OK")
</pallas_src>

<mosaic_0001>
module attributes {stable_mosaic.version = 11 : i64} {
  func.func @_linear_kernel(%arg0: i32, %arg1: memref<16x16xf32, #tpu.memory_space<vmem>>, %arg2: memref<16x32xbf16, #tpu.memory_space<vmem>>, %arg3: memref<1x32xf32, #tpu.memory_space<vmem>>, %arg4: memref<16x32xf32, #tpu.memory_space<vmem>>) attributes {dimension_semantics = [#tpu.dimension_semantics<parallel>], iteration_bounds = array<i64: 1>, scalar_prefetch = 0 : i64, scratch_operands = 0 : i64, tpu.core_type = #tpu.core_type<tc>, window_params = [{transform_indices = @transform_0, window_bounds = array<i64: 16, 16>}, {pipeline_mode = #tpu.pipeline_mode<synchronous>, transform_indices = @transform_1, window_bounds = array<i64: 16, 32>}, {pipeline_mode = #tpu.pipeline_mode<synchronous>, transform_indices = @transform_2, window_bounds = array<i64: 1, 32>}, {transform_indices = @transform_3, window_bounds = array<i64: 16, 32>}]} {
    %c0 = arith.constant 0 : index
    %c0_0 = arith.constant 0 : index
    %0 = vector.load %arg1[%c0, %c0_0] : memref<16x16xf32, #tpu.memory_space<vmem>>, vector<16x16xf32>
    %1 = arith.truncf %0 : vector<16x16xf32> to vector<16x16xbf16>
    %c0_1 = arith.constant 0 : index
    %c0_2 = arith.constant 0 : index
    %2 = vector.load %arg2[%c0_1, %c0_2] : memref<16x32xbf16, #tpu.memory_space<vmem>>, vector<16x32xbf16>
    %cst = arith.constant dense<0.000000e+00> : vector<16x32xf32>
    %3 = tpu.matmul %1, %2, %cst {dimension_numbers = #tpu.dot_dimension_numbers<[1], [0], [0], [1], [0, 0, 1, 1], [], []>} : vector<16x16xbf16>, vector<16x32xbf16>, vector<16x32xf32> -> vector<16x32xf32>
    %c0_3 = arith.constant 0 : index
    %c0_4 = arith.constant 0 : index
    %4 = vector.load %arg3[%c0_3, %c0_4] : memref<1x32xf32, #tpu.memory_space<vmem>>, vector<1x32xf32>
    %5 = vector.broadcast %4 : vector<1x32xf32> to vector<16x32xf32>
    %6 = arith.addf %3, %5 : vector<16x32xf32>
    %c0_5 = arith.constant 0 : index
    %c0_6 = arith.constant 0 : index
    %7 = vector.load %arg4[%c0_5, %c0_6] : memref<16x32xf32, #tpu.memory_space<vmem>>, vector<16x32xf32>
    tpu.vector_store %arg4[%c0_5, %c0_6], %6 {strides = array<i32>} : memref<16x32xf32, #tpu.memory_space<vmem>>, vector<16x32xf32>,
    return
  }
  func.func @transform_0(%arg0: i32) -> (i32, i32) {
    %c0_i32 = arith.constant 0 : i32
    %c0_i32_0 = arith.constant 0 : i32
    return %arg0, %c0_i32 : i32, i32
  }
  func.func @transform_1(%arg0: i32) -> (i32, i32) {
    %c0_i32 = arith.constant 0 : i32
    %c0_i32_0 = arith.constant 0 : i32
    %c0_i32_1 = arith.constant 0 : i32
    return %c0_i32, %c0_i32_0 : i32, i32
  }
  func.func @transform_2(%arg0: i32) -> (i32, i32) {
    %c0_i32 = arith.constant 0 : i32
    %c0_i32_0 = arith.constant 0 : i32
    %c0_i32_1 = arith.constant 0 : i32
    return %c0_i32, %c0_i32_0 : i32, i32
  }
  func.func @transform_3(%arg0: i32) -> (i32, i32) {
    %c0_i32 = arith.constant 0 : i32
    %c0_i32_0 = arith.constant 0 : i32
    return %arg0, %c0_i32 : i32, i32
  }
}

</mosaic_0001>

<llo_original>
// kernel: tpu_custom_call.1
$region0: #{tpu_custom_call.1}
  #allocation0 [shape = 'u32[]', space=smem, size = 0x4, offset = 0x4, fixed_abs, tag = 'smem constant byte address 0x4 - core index']
  #allocation1 [shape = 'u32[72,128]{1,0:T(1,128)}', space=vmem, size = 0x9000, scoped, tag = 'internal scratch']
  %s0 = inlined_call_operand.hbm [shape: f32[16,16], index: 0, kind: input, shape index: {}]
  %s1 = inlined_call_operand.hbm [shape: bf16[16,32], index: 1, kind: input, shape index: {}]
  %s2 = inlined_call_operand.vmem [shape: f32[1,32], index: 2, kind: input, shape index: {}]
  %s3 = inlined_call_operand.hbm [shape: f32[16,32], index: 3, kind: output, shape index: {}]
  %s4 = sld [smem:[#allocation0]]
  $region30: #{tpu_custom_call.1} parent=0
    _
  %s6 = ssub.s32 1, %s4
  %s7 = scalar_select 0, %s6, %s4
  $region1: #{tpu_custom_call.1} parent=0
    #allocation2 [shape = 'u8[8192]{0}', space=vmem, size = 0x2000, scoped, tag = 'input window, operand 0, single buffered']
    #allocation3 [shape = 's32[1]{0}', space=sflag, size = 0x4, scoped, tag = 'scoped memory for tpu_custom_call.1']
    #allocation4 [shape = 's32[1]{0}', space=sflag, size = 0x4, scoped, tag = 'scoped memory for tpu_custom_call.1']
    #allocation5 [shape = 'u8[4096]{0}', space=vmem, size = 0x1000, scoped, tag = 'input window, operand 1, single buffered']
    #allocation6 [shape = 's32[1]{0}', space=sflag, size = 0x4, scoped, tag = 'scoped memory for tpu_custom_call.1']
    #allocation7 [shape = 'u8[8192]{0}', space=vmem, size = 0x2000, scoped, tag = 'output window, operand 0, single buffered']
    %8 = vsyncpa [#allocation3], 0
    %9 = vsyncpa [#allocation6], 0
    %10 = vsyncpa [#allocation4], 0
    // Predicated region
    $region2: #{tpu_custom_call.1} parent=1 // pred_check
      _
    $region3: #{tpu_custom_call.1} parent=1 // pred_check_branch
      %12 = sbr.rel (0) target = $region5
    $region4: #{tpu_custom_call.1} parent=1 // pred_region
      %14 = vsyncadd [#allocation3], 0
      %s15 = sshll.u32 %s0, 4
      %s16 = int_to_ptr.hbm [resolvable:$true] %s15
      %s17 = sshll.u32 [#allocation2], 4
      %s18 = int_to_ptr.vmem [resolvable:$true] %s17
      %23 = dma.hbm_to_vmem [thread:$0]  %s16, 256, %s18, [#allocation3], 128, 128, 8
    $region5: #{tpu_custom_call.1} parent=1 // pred_fallthru
      _
    // Predicated region
    $region6: #{tpu_custom_call.1} parent=1 // pred_check
      _
    $region7: #{tpu_custom_call.1} parent=1 // pred_check_branch
      %25 = sbr.rel (0) target = $region9
    $region8: #{tpu_custom_call.1} parent=1 // pred_region
      %27 = vsyncadd [#allocation6], 0
      %s28 = sshll.u32 %s1, 4
      %s29 = int_to_ptr.hbm [resolvable:$true] %s28
      %s30 = sshll.u32 [#allocation5], 4
      %s31 = int_to_ptr.vmem [resolvable:$true] %s30
      %36 = dma.hbm_to_vmem [thread:$0]  %s29, 128, %s31, [#allocation6], 64, 64, 4
    $region9: #{tpu_custom_call.1} parent=1 // pred_fallthru
      _
    // Predicated region
    $region10: #{tpu_custom_call.1} parent=1 // pred_check
      _
    $region11: #{tpu_custom_call.1} parent=1 // pred_check_branch
      %38 = sbr.rel (0) target = $region13
    $region12: #{tpu_custom_call.1} parent=1 // pred_region
      _
    $region13: #{tpu_custom_call.1} parent=1 // pred_fallthru
      _
    // Predicated region
    $region14: #{tpu_custom_call.1} parent=1 // pred_check
      _
    $region15: #{tpu_custom_call.1} parent=1 // pred_check_branch
      %40 = sbr.rel (0) target = $region17
    $region16: #{tpu_custom_call.1} parent=1 // pred_region
      %42 = dma.done [#allocation3], 256
    $region17: #{tpu_custom_call.1} parent=1 // pred_fallthru
      _
    // Predicated region
    $region18: #{tpu_custom_call.1} parent=1 // pred_check
      _
    $region19: #{tpu_custom_call.1} parent=1 // pred_check_branch
      %44 = sbr.rel (0) target = $region21
    $region20: #{tpu_custom_call.1} parent=1 // pred_region
      %46 = dma.done [#allocation6], 128
    $region21: #{tpu_custom_call.1} parent=1 // pred_fallthru
      _
    %v48 = vld [vmem:[#allocation2] sm:$0xff]
    %v49 = vld [vmem:[#allocation2 + $0x8] sm:$0xff]
    %v50 = vpack.c.bf16 %v49, %v48
    %v51 = vld [vmem:[#allocation5] sm:$0xf]
    %v52 = vld [vmem:[#allocation5 + $0x4] sm:$0xf]
    %v53 = vld [vmem:[%s2] sm:$0x1]
    %v55 = vperm.slane %v53, 0
    %v59 = vunpack.c.l.b16 %v51
    %v60 = vunpack.c.l.b16 %v52
    %v61 = vpack.c.b16 %v60, %v59
    %vm63 = vcmask 130048
    %v65 = vsel %vm63, %v50, 0
    %67 = vmatpush.bf16.msra.mxu0 0
    %68 = vmatpush.bf16.msra.mxu0 0
    %69 = vmatpush.bf16.msra.mxu0 0
    %70 = vmatpush.bf16.msra.mxu0 0
    %71 = vmatpush.bf16.msra.mxu0 0
    %72 = vmatpush.bf16.msra.mxu0 0
    %73 = vmatpush.bf16.msra.mxu0 0
    %74 = vmatpush.bf16.msra.mxu0 %v61
    %75 = vmatmul.bf16.gmra.mxu0 %v65
    %v76 = vpop.f32.mrf.mxu0
    %v77 = vadd.f32 %v55, %v76
    %v78 = vpop.f32.mrf.mxu0
    %v79 = vadd.f32 %v55, %v78
    %80 = vdwg.mxu0
    %vm81 = vcmask 261120
    %82 = vst.msk [vmem:[#allocation7] sm:$0xff] %vm81, %v77
    %83 = vst.msk [vmem:[#allocation7 + $0x8] sm:$0xff] %vm81, %v79
    // Predicated region
    $region22: #{tpu_custom_call.1} parent=1 // pred_check
      _
    $region23: #{tpu_custom_call.1} parent=1 // pred_check_branch
      %85 = sbr.rel (0) target = $region25
    $region24: #{tpu_custom_call.1} parent=1 // pred_region
      %87 = vsyncadd [#allocation4], 0
      %s88 = sshll.u32 [#allocation7], 4
      %s89 = int_to_ptr.vmem [resolvable:$true] %s88
      %s90 = sshll.u32 %s3, 4
      %s91 = int_to_ptr.hbm [resolvable:$true] %s90
      %96 = dma.vmem_to_hbm [thread:$0]  %s89, 256, %s91, [#allocation4], 128, 128, 8
    $region25: #{tpu_custom_call.1} parent=1 // pred_fallthru
      _
    // Predicated region
    $region26: #{tpu_custom_call.1} parent=1 // pred_check
      _
    $region27: #{tpu_custom_call.1} parent=1 // pred_check_branch
      %98 = sbr.rel (0) target = $region29
    $region28: #{tpu_custom_call.1} parent=1 // pred_region
      %100 = dma.done [#allocation4], 256
    $region29: #{tpu_custom_call.1} parent=1 // pred_fallthru
      _
    %101 = vsyncpa [#allocation3], 1
    %102 = vsyncpa [#allocation6], 1
    %103 = vsyncpa [#allocation4], 1

</llo_original>
